<compile_context>
chip_gen: v7x
topology: tpu7x:2x2x1
jax: 0.10.0
libtpu: 0.0.40
codegen_flags: <defaults>
</compile_context>

<pallas_src>
import jax
import jax.numpy as jnp
from jax.experimental import pallas as pl
from jax.experimental.pallas import tpu as pltpu


N_EMBD = 256                   # config['n_embd']
N_HEAD = 4                     # config['n_head']
HEAD_SIZE = N_EMBD // N_HEAD   # 64
BLOCK_SIZE = 128               # causal-mask buffer size in the reference
LANE = 128                     # TPU vreg lane width


def _attention_head_kernel(x_ref, wqkv_ref, o_ref):
    """Single causal attention head over a block of BB batch elements.

    x_ref:    (BB, T, C)   bf16 activations
    wqkv_ref: (C, 3*HP)    bf16 fused [Wk | 0 | Wq*scale | 0 | Wv | 0]; each
                           projection sits in its own 128-lane bank so the
                           slices below are lane-aligned.
    o_ref:    (BB, T, H)   f32
    """
    BB, T, C = x_ref.shape
    H = o_ref.shape[-1]
    HP = wqkv_ref.shape[-1] // 3

    # ---- fused QKV projection: one wide bf16 MXU matmul, f32 accumulation ----
    # NOTE: the reshape is a free retile when T is a multiple of 8 (sublanes).
    x2 = x_ref[...].reshape(BB * T, C)
    qkv = jnp.dot(x2, wqkv_ref[...], preferred_element_type=jnp.float32)
    qkv = qkv.astype(jnp.bfloat16)            # single cast, reused for k/q/v

    # Lane-aligned slices (offsets 0, HP, 2*HP are multiples of 128).
    k = qkv[:, 0 * HP:1 * HP].reshape(BB, T, HP)       # zero-padded cols H..HP
    q = qkv[:, 1 * HP:2 * HP].reshape(BB, T, HP)       # already scaled by C**-0.5
    v = qkv[:, 2 * HP:2 * HP + H].reshape(BB, T, H)

    # ---- attention scores (contract on head dim; no explicit transpose) ----
    wei = jnp.einsum('bqh,bkh->bqk', q, k, preferred_element_type=jnp.float32)

    # ---- causal mask: one (T, T) additive bias, broadcast over BB ----
    row = jax.lax.broadcasted_iota(jnp.int32, (T, T), 0)
    col = jax.lax.broadcasted_iota(jnp.int32, (T, T), 1)
    bias = jnp.where(row >= col, jnp.float32(0.0), jnp.float32(-1e30))
    wei = wei + bias[None, :, :]

    # ---- numerically stable softmax (f32); EUP reciprocal for the denom ----
    wei = wei - jnp.max(wei, axis=-1, keepdims=True)
    p = jnp.exp(wei)
    denom = jnp.sum(p, axis=-1, keepdims=True)
    p = (p * pl.reciprocal(denom, approx=True)).astype(jnp.bfloat16)

    # ---- weighted values ----
    out = jnp.einsum('bqk,bkh->bqh', p, v, preferred_element_type=jnp.float32)
    o_ref[...] = out.astype(o_ref.dtype)


def attention_head(x, wk_t, wq_t, wv_t, *, batch_block=16):
    """Forward pass of `AttentionHead`.

    x:    (B, T, C) float32
    w*_t: (C, H)    float32 (transposed bias-free nn.Linear weights)
    Returns (B, T, H) float32.
    """
    B, T, C = x.shape
    H = wk_t.shape[1]
    assert T <= BLOCK_SIZE, "sequence length must not exceed block_size"

    # ---- wrapper-side weight prep (tiny, one-off XLA work) ------------------
    #  * softmax scale (C ** -0.5, as in the reference) folded into Wq
    #  * each projection padded to its own 128-lane bank
    #  * bf16 so no in-kernel casts are needed before the MXU
    HP = max(LANE, pl.cdiv(H, LANE) * LANE)
    scale = jnp.float32(C) ** jnp.float32(-0.5)
    zpad = jnp.zeros((C, HP - H), dtype=x.dtype)
    w_qkv = jnp.concatenate(
        [wk_t, zpad, wq_t * scale, zpad, wv_t, zpad], axis=1
    ).astype(jnp.bfloat16)

    # bf16 activations: halves the dominant HBM->VMEM DMA traffic.
    x_bf = x.astype(jnp.bfloat16)

    # ---- batch blocking ------------------------------------------------------
    # Keep grid length >= 2 (pipelining + both v7x TensorCores); for awkward B
    # pad the batch up to a multiple of BB instead of shrinking BB toward 1.
    if B > 1:
        n_blocks = max(2, pl.cdiv(B, batch_block))
        BB = pl.cdiv(B, n_blocks)
        n_blocks = pl.cdiv(B, BB)
    else:
        BB, n_blocks = 1, 1
    Bp = BB * n_blocks
    if Bp != B:
        x_bf = jnp.pad(x_bf, ((0, Bp - B), (0, 0), (0, 0)))

    # ---- explicit VMEM limit, sized for v7x's 64 MiB per-TC VMEM ------------
    est = (2 * BB * T * C * 2                 # x double buffer (bf16)
           + C * 3 * HP * 2                   # resident fused weights (bf16)
           + BB * T * 3 * HP * (4 + 2)        # qkv f32 + bf16 copy
           + 3 * BB * T * T * 4               # wei / p (f32) + p (bf16)
           + 3 * BB * T * H * 4)              # out f32 + output double buffer
    vmem_limit = int(min(48 * 2**20, max(32 * 2**20, 2 * est)))

    x_spec = pl.BlockSpec((BB, T, C), lambda b: (b, 0, 0))
    w_spec = pl.BlockSpec((C, 3 * HP), lambda b: (0, 0))   # constant -> VMEM-resident
    o_spec = pl.BlockSpec((BB, T, H), lambda b: (b, 0, 0))

    out = pl.pallas_call(
        _attention_head_kernel,
        out_shape=jax.ShapeDtypeStruct((Bp, T, H), jnp.float32),
        grid_spec=pl.GridSpec(
            grid=(n_blocks,),
            in_specs=[x_spec, w_spec],
            out_specs=o_spec,
        ),
        compiler_params=pltpu.CompilerParams(
            dimension_semantics=("parallel",),
            vmem_limit_bytes=vmem_limit,
        ),
    )(x_bf, w_qkv)

    return out[:B] if Bp != B else out


def _reference(x, wk_t, wq_t, wv_t):
    """Pure-JAX f32 reference mirroring the PyTorch forward pass."""
    B, T, C = x.shape
    k = x @ wk_t
    q = x @ wq_t
    v = x @ wv_t
    wei = (q @ jnp.swapaxes(k, -2, -1)) * (C ** -0.5)
    tril = jnp.tril(jnp.ones((T, T), dtype=bool))
    wei = jnp.where(tril[None, :, :], wei, -jnp.inf)
    wei = jax.nn.softmax(wei, axis=-1)
    return wei @ v


if __name__ == "__main__":
    key = jax.random.PRNGKey(0)
    kx, kk, kq, kv, kx2 = jax.random.split(key, 5)

    C, H = N_EMBD, HEAD_SIZE

    # nn.Linear weight is (out, in) = (H, C); pass the transposed (C, H) version.
    wk_t = (jax.random.normal(kk, (H, C), dtype=jnp.float32) * 0.02).T
    wq_t = (jax.random.normal(kq, (H, C), dtype=jnp.float32) * 0.02).T
    wv_t = (jax.random.normal(kv, (H, C), dtype=jnp.float32) * 0.02).T

    # Small-shape check (B=2, T=8).
    B, T = 2, 8
    x = jax.random.normal(kx, (B, T, C), dtype=jnp.float32)
    out = jax.block_until_ready(attention_head(x, wk_t, wq_t, wv_t))
    ref = _reference(x, wk_t, wq_t, wv_t)
    assert out.shape == (B, T, H)
    # bf16 MXU inputs + approx reciprocal -> slightly looser tolerance than f32.
    assert jnp.allclose(out, ref, atol=2e-2, rtol=2e-2), "mismatch vs reference"

    # Exercise batch padding + full block_size sequence (B=5, T=128).
    B2, T2 = 5, BLOCK_SIZE
    x2 = jax.random.normal(kx2, (B2, T2, C), dtype=jnp.float32)
    out2 = jax.block_until_ready(attention_head(x2, wk_t, wq_t, wv_t))
    ref2 = _reference(x2, wk_t, wq_t, wv_t)
    assert out2.shape == (B2, T2, H)
    assert jnp.allclose(out2, ref2, atol=2e-2, rtol=2e-2), "mismatch vs reference (padded)"

    print("KERNEL_OK")
</pallas_src>

<mosaic_0001>
module attributes {stable_mosaic.version = 11 : i64} {
  func.func @_attention_head_kernel(%arg0: i32, %arg1: memref<1x8x256xbf16, #tpu.memory_space<vmem>>, %arg2: memref<256x384xbf16, #tpu.memory_space<vmem>>, %arg3: memref<1x8x64xf32, #tpu.memory_space<vmem>>) attributes {dimension_semantics = [#tpu.dimension_semantics<parallel>], iteration_bounds = array<i64: 2>, scalar_prefetch = 0 : i64, scratch_operands = 0 : i64, tpu.core_type = #tpu.core_type<tc>, window_params = [{transform_indices = @transform_0, window_bounds = array<i64: 1, 8, 256>}, {pipeline_mode = #tpu.pipeline_mode<synchronous>, transform_indices = @transform_1, window_bounds = array<i64: 256, 384>}, {transform_indices = @transform_2, window_bounds = array<i64: 1, 8, 64>}]} {
    %c0 = arith.constant 0 : index
    %c0_0 = arith.constant 0 : index
    %c0_1 = arith.constant 0 : index
    %0 = vector.load %arg1[%c0, %c0_0, %c0_1] : memref<1x8x256xbf16, #tpu.memory_space<vmem>>, vector<1x8x256xbf16>
    %1 = vector.shape_cast %0 : vector<1x8x256xbf16> to vector<8x256xbf16>
    %c0_2 = arith.constant 0 : index
    %c0_3 = arith.constant 0 : index
    %2 = vector.load %arg2[%c0_2, %c0_3] : memref<256x384xbf16, #tpu.memory_space<vmem>>, vector<256x384xbf16>
    %cst = arith.constant dense<0.000000e+00> : vector<8x384xf32>
    %3 = tpu.matmul %1, %2, %cst {dimension_numbers = #tpu.dot_dimension_numbers<[1], [0], [0], [1], [0, 0, 1, 1], [], []>} : vector<8x256xbf16>, vector<256x384xbf16>, vector<8x384xf32> -> vector<8x384xf32>
    %4 = arith.truncf %3 : vector<8x384xf32> to vector<8x384xbf16>
    %5 = vector.extract_strided_slice %4 {offsets = [0, 0], sizes = [8, 128], strides = [1, 1]} : vector<8x384xbf16> to vector<8x128xbf16>
    %6 = vector.shape_cast %5 : vector<8x128xbf16> to vector<1x8x128xbf16>
    %7 = vector.extract_strided_slice %4 {offsets = [0, 128], sizes = [8, 128], strides = [1, 1]} : vector<8x384xbf16> to vector<8x128xbf16>
    %8 = vector.shape_cast %7 : vector<8x128xbf16> to vector<1x8x128xbf16>
    %9 = vector.extract_strided_slice %4 {offsets = [0, 256], sizes = [8, 64], strides = [1, 1]} : vector<8x384xbf16> to vector<8x64xbf16>
    %10 = vector.shape_cast %9 : vector<8x64xbf16> to vector<1x8x64xbf16>
    "tpu.trace_start"() <{level = 10 : i32, message = "bqh,bkh->bqk"}> : () -> ()
    %cst_4 = arith.constant dense<0.000000e+00> : vector<1x8x8xf32>
    %11 = tpu.matmul %8, %6, %cst_4 {dimension_numbers = #tpu.dot_dimension_numbers<[2], [2], [1], [1], [0, 0, 0, 1, 1, 1], [0], [0]>} : vector<1x8x128xbf16>, vector<1x8x128xbf16>, vector<1x8x8xf32> -> vector<1x8x8xf32>
    "tpu.trace_stop"() : () -> ()
    %12 = tpu.iota {dimensions = array<i32: 0>} : vector<8x8xi32>
    %13 = tpu.iota {dimensions = array<i32: 1>} : vector<8x8xi32>
    %14 = arith.cmpi sge, %12, %13 : vector<8x8xi32>
    %cst_5 = arith.constant 0.000000e+00 : f32
    %cst_6 = arith.constant -1.000000e+30 : f32
    %15 = vector.broadcast %cst_5 : f32 to vector<8x8xf32>
    %16 = vector.broadcast %cst_6 : f32 to vector<8x8xf32>
    %17 = arith.select %14, %15, %16 : vector<8x8xi1>, vector<8x8xf32>
    %18 = vector.shape_cast %17 : vector<8x8xf32> to vector<1x8x8xf32>
    %19 = arith.addf %11, %18 : vector<1x8x8xf32>
    %cst_7 = arith.constant dense<0xFF800000> : vector<1x8xf32>
    %20 = vector.multi_reduction <maximumf>, %19, %cst_7 [2] : vector<1x8x8xf32> to vector<1x8xf32>
    %21 = vector.shape_cast %20 : vector<1x8xf32> to vector<1x8x1xf32>
    %22 = vector.broadcast %21 : vector<1x8x1xf32> to vector<1x8x8xf32>
    %23 = arith.subf %19, %22 : vector<1x8x8xf32>
    %24 = math.exp %23 : vector<1x8x8xf32>
    %cst_8 = arith.constant dense<0.000000e+00> : vector<1x8xf32>
    %25 = vector.multi_reduction <add>, %24, %cst_8 [2] : vector<1x8x8xf32> to vector<1x8xf32>
    %26 = vector.shape_cast %25 : vector<1x8xf32> to vector<1x8x1xf32>
    %27 = tpu.reciprocal %26 {approx = true} : vector<1x8x1xf32> -> vector<1x8x1xf32>
    %28 = vector.broadcast %27 : vector<1x8x1xf32> to vector<1x8x8xf32>
    %29 = arith.mulf %24, %28 : vector<1x8x8xf32>
    %30 = arith.truncf %29 : vector<1x8x8xf32> to vector<1x8x8xbf16>
    "tpu.trace_start"() <{level = 10 : i32, message = "bqk,bkh->bqh"}> : () -> ()
    %cst_9 = arith.constant dense<0.000000e+00> : vector<1x8x64xf32>
    %31 = tpu.matmul %30, %10, %cst_9 {dimension_numbers = #tpu.dot_dimension_numbers<[2], [1], [1], [2], [0, 0, 0, 1, 1, 2], [0], [0]>} : vector<1x8x8xbf16>, vector<1x8x64xbf16>, vector<1x8x64xf32> -> vector<1x8x64xf32>
    "tpu.trace_stop"() : () -> ()
    %c0_10 = arith.constant 0 : index
    %c0_11 = arith.constant 0 : index
    %c0_12 = arith.constant 0 : index
    %32 = vector.load %arg3[%c0_10, %c0_11, %c0_12] : memref<1x8x64xf32, #tpu.memory_space<vmem>>, vector<1x8x64xf32>
    tpu.vector_store %arg3[%c0_10, %c0_11, %c0_12], %31 {strides = array<i32>} : memref<1x8x64xf32, #tpu.memory_space<vmem>>, vector<1x8x64xf32>,
    return
  }
  func.func @transform_0(%arg0: i32) -> (i32, i32, i32) {
    %c0_i32 = arith.constant 0 : i32
    %c0_i32_0 = arith.constant 0 : i32
    %c0_i32_1 = arith.constant 0 : i32
    return %arg0, %c0_i32, %c0_i32_0 : i32, i32, i32
  }
  func.func @transform_1(%arg0: i32) -> (i32, i32) {
    %c0_i32 = arith.constant 0 : i32
    %c0_i32_0 = arith.constant 0 : i32
    %c0_i32_1 = arith.constant 0 : i32
    return %c0_i32, %c0_i32_0 : i32, i32
  }
  func.func @transform_2(%arg0: i32) -> (i32, i32, i32) {
    %c0_i32 = arith.constant 0 : i32
    %c0_i32_0 = arith.constant 0 : i32
    %c0_i32_1 = arith.constant 0 : i32
    return %arg0, %c0_i32, %c0_i32_0 : i32, i32, i32
  }
}

</mosaic_0001>

<llo_original>
// kernel: tpu_custom_call.1
$region0: #{tpu_custom_call.1}
  #allocation0 [shape = 'u32[]', space=smem, size = 0x4, offset = 0x4, fixed_abs, tag = 'smem constant byte address 0x4 - core index']
  #allocation1 [shape = 'u32[144,128]{1,0:T(1,128)}', space=vmem, size = 0x12000, scoped, tag = 'internal scratch']
  %s0 = inlined_call_operand.hbm [shape: bf16[2,8,256], index: 0, kind: input, shape index: {}]
  %s1 = inlined_call_operand.hbm [shape: bf16[256,384], index: 1, kind: input, shape index: {}]
  %s2 = inlined_call_operand.hbm [shape: f32[2,8,64], index: 2, kind: output, shape index: {}]
  %s3 = sld [smem:[#allocation0]]
  $region49: #{tpu_custom_call.1} parent=0
    _
  %s5 = ssub.s32 1, %s3
  %s6 = scalar_select 0, %s5, %s3
  $region1: #{tpu_custom_call.1} parent=0
    #allocation2 [shape = 'u8[8192]{0}', space=vmem, size = 0x2000, scoped, tag = 'input window, operand 0']
    #allocation3 [shape = 's32[2]{0}', space=sflag, size = 0x8, scoped, tag = 'scoped memory for tpu_custom_call.1']
    #allocation4 [shape = 's32[2]{0}', space=sflag, size = 0x8, scoped, tag = 'scoped memory for tpu_custom_call.1']
    #allocation5 [shape = 'u8[196608]{0}', space=vmem, size = 0x30000, scoped, tag = 'input window, operand 1, single buffered']
    #allocation6 [shape = 's32[1]{0}', space=sflag, size = 0x4, scoped, tag = 'scoped memory for tpu_custom_call.1']
    #allocation7 [shape = 'u8[8192]{0}', space=vmem, size = 0x2000, scoped, tag = 'output window, operand 0']
    %7 = vsyncpa [#allocation3], 0
    %s8 = scalar_lea.sflag [#allocation3], 1
    %9 = vsyncpa %s8, 0
    %10 = vsyncpa [#allocation6], 0
    %11 = vsyncpa [#allocation4], 0
    %s12 = scalar_lea.sflag [#allocation4], 1
    %13 = vsyncpa %s12, 0
    loop: start=0, step=1, limit=4
    $region2: #{tpu_custom_call.1} parent=1 // loop_pre_header
      _
    $region3: #{tpu_custom_call.1} parent=1 // loop_header
      %s15 = sphi 0, %s19
      %p16 = scmp.ge.s32.totalorder %s15, 4
      %s25 = sphi 0, %s27
      %s28 = sphi 0, %s25
      %s29 = sphi 0, %s28
      %s45 = sphi 0, %s29
      %s49 = sphi 0, %s49
      %s51 = sphi 0, %s49
      %s52 = sphi 0, %s51
      %s66 = sphi 0, %s52
      %s72 = sphi 0, %s74
      %s75 = sphi 0, %s72
      %s76 = sphi 0, %s75
      %s92 = sphi 0, %s76
    $region4: #{tpu_custom_call.1} parent=1 // loop_header_branch
      %18 = sbr.rel (%p16) target = $region8
    $region5: #{tpu_custom_call.1} parent=1 // loop_body
      %s20 = ssub.s32 %s15, 1
      %s21 = ssub.s32 %s15, 2
      %s22 = sadd.s32 %s15, 1
      %s23 = ssub.s32 %s15, %s22
      %p24 = scmp.eq.s32.totalorder %s23, 0
      %s26 = sadd.s32 %s25, 1
      %s27 = scalar_select %p24, %s25, %s26
      %p30 = pneg %p24
      %p31 = scmp.eq.s32.totalorder %s15, 1
      %p32 = por %p30, %p31
      %p33 = scmp.ne.s32.totalorder %s25, %s28
      %p34 = scmp.eq.s32.totalorder %s15, 0
      %p35 = por %p33, %p34
      %p36 = scmp.ne.s32.totalorder %s25, %s28
      %p37 = scmp.eq.s32.totalorder %s20, 1
      %p38 = por %p36, %p37
      %p39 = scmp.ne.s32.totalorder %s28, %s29
      %p40 = scmp.eq.s32.totalorder %s20, 0
      %p41 = por %p39, %p40
      %p42 = scmp.ne.s32.totalorder %s28, %s29
      %p43 = scmp.eq.s32.totalorder %s21, 1
      %p44 = por %p42, %p43
      %p46 = scmp.ne.s32.totalorder %s29, %s45
      %p47 = scmp.eq.s32.totalorder %s21, 0
      %p48 = por %p46, %p47
      %s50 = sadd.s32 %s49, 1
      %p53 = scmp.eq.s32.totalorder %s15, 1
      %p54 = scmp.ne.s32.totalorder %s49, %s51
      %p55 = scmp.eq.s32.totalorder %s15, 0
      %p56 = por %p54, %p55
      %p57 = scmp.ne.s32.totalorder %s49, %s51
      %p58 = scmp.eq.s32.totalorder %s20, 1
      %p59 = por %p57, %p58
      %p60 = scmp.ne.s32.totalorder %s51, %s52
      %p61 = scmp.eq.s32.totalorder %s20, 0
      %p62 = por %p60, %p61
      %p63 = scmp.ne.s32.totalorder %s51, %s52
      %p64 = scmp.eq.s32.totalorder %s21, 1
      %p65 = por %p63, %p64
      %p67 = scmp.ne.s32.totalorder %s52, %s66
      %p68 = scmp.eq.s32.totalorder %s21, 0
      %p69 = por %p67, %p68
      %s70 = ssub.s32 %s15, %s22
      %p71 = scmp.eq.s32.totalorder %s70, 0
      %s73 = sadd.s32 %s72, 1
      %s74 = scalar_select %p71, %s72, %s73
      %p77 = pneg %p71
      %p78 = scmp.eq.s32.totalorder %s15, 1
      %p79 = por %p77, %p78
      %p80 = scmp.ne.s32.totalorder %s72, %s75
      %p81 = scmp.eq.s32.totalorder %s15, 0
      %p82 = por %p80, %p81
      %p83 = scmp.ne.s32.totalorder %s72, %s75
      %p84 = scmp.eq.s32.totalorder %s20, 1
      %p85 = por %p83, %p84
      %p86 = scmp.ne.s32.totalorder %s75, %s76
      %p87 = scmp.eq.s32.totalorder %s20, 0
      %p88 = por %p86, %p87
      %p89 = scmp.ne.s32.totalorder %s75, %s76
      %p90 = scmp.eq.s32.totalorder %s21, 1
      %p91 = por %p89, %p90
      %p93 = scmp.ne.s32.totalorder %s76, %s92
      %p94 = scmp.eq.s32.totalorder %s21, 0
      %p95 = por %p93, %p94
      %p96 = scmp.le.s32.totalorder 1, %s15
      %p97 = scmp.lt.s32.totalorder %s15, 3
      %p98 = pnand %p96, %p97
      %p99 = pneg %p98
      // Predicated region
      $region9: #{tpu_custom_call.1} parent=5 // pred_check
        _
      $region10: #{tpu_custom_call.1} parent=5 // pred_check_branch
        %101 = sbr.rel (%p98) target = $region12
      $region11: #{tpu_custom_call.1} parent=5 // pred_region
        %s102 = ssub.s32 %s15, 1
        // Predicated region
        $region13: #{tpu_custom_call.1} parent=11 // pred_check
          %p103 = pneg %p62
        $region14: #{tpu_custom_call.1} parent=11 // pred_check_branch
          %105 = sbr.rel (%p103) target = $region16
        $region15: #{tpu_custom_call.1} parent=11 // pred_region
          %s107 = ssub.s32 6144, 6144
          %108 = vsyncadd [#allocation6], %s107
          %s109 = sshll.u32 [#allocation5], 4
          %s110 = int_to_ptr.vmem [resolvable:$true] %s109
          %115 = dma.hbm_to_vmem [thread:$0]  %s1, 6144, %s110, [#allocation6], 192, 192, 12
        $region16: #{tpu_custom_call.1} parent=11 // pred_fallthru
          _
      $region12: #{tpu_custom_call.1} parent=5 // pred_fallthru
        _
      %p116 = scmp.lt.s32.totalorder %s15, 2
      // Predicated region
      $region17: #{tpu_custom_call.1} parent=5 // pred_check
        %p117 = pneg %p116
      $region18: #{tpu_custom_call.1} parent=5 // pred_check_branch
        %119 = sbr.rel (%p117) target = $region20
      $region19: #{tpu_custom_call.1} parent=5 // pred_region
        // Predicated region
        $region21: #{tpu_custom_call.1} parent=19 // pred_check
          %p120 = pneg %p35
        $region22: #{tpu_custom_call.1} parent=19 // pred_check_branch
          %122 = sbr.rel (%p120) target = $region24
        $region23: #{tpu_custom_call.1} parent=19 // pred_region
          %s123 = sand.u32 %s25, 1
          %s124 = scalar_lea.sflag [#allocation3], %s123
          %s125 = sand.u32 %s25, 1
          %s126 = smul.addr %s125, 8
          %s127 = scalar_lea.vmem [#allocation2], %s126
          %s129 = ssub.s32 128, 128
          %130 = vsyncadd %s124, %s129
          %s131 = smul.addr %s15, 2
          %s132 = smul.addr %s131, 64
          %s133 = scalar_lea.hbm %s0, %s132
          %s135 = sshll.u32 %s127, 4
          %s136 = int_to_ptr.vmem [resolvable:$true] %s135
          %138 = dma.hbm_to_vmem [thread:$0]  %s133, 128, %s136, %s124
        $region24: #{tpu_custom_call.1} parent=19 // pred_fallthru
          _
      $region20: #{tpu_custom_call.1} parent=5 // pred_fallthru
        _
      %p139 = scmp.le.s32.totalorder 1, %s15
      %p140 = scmp.lt.s32.totalorder %s15, 3
      %p141 = pnand %p139, %p140
      %p142 = pneg %p141
      // Predicated region
      $region25: #{tpu_custom_call.1} parent=5 // pred_check
        _
      $region26: #{tpu_custom_call.1} parent=5 // pred_check_branch
        %144 = sbr.rel (%p141) target = $region28
      $region27: #{tpu_custom_call.1} parent=5 // pred_region
        %s145 = ssub.s32 %s15, 1
        %s146 = sand.u32 %s28, 1
        %s147 = scalar_lea.sflag [#allocation3], %s146
        %s148 = sand.u32 %s28, 1
        %s149 = smul.addr %s148, 8
        %s150 = scalar_lea.vmem [#allocation2], %s149
        // Predicated region
        $region29: #{tpu_custom_call.1} parent=27 // pred_check
          %p151 = pneg %p41
        $region30: #{tpu_custom_call.1} parent=27 // pred_check_branch
          %153 = sbr.rel (%p151) target = $region32
        $region31: #{tpu_custom_call.1} parent=27 // pred_region
          %154 = dma.done %s147, 128
        $region32: #{tpu_custom_call.1} parent=27 // pred_fallthru
          _
        // Predicated region
        $region33: #{tpu_custom_call.1} parent=27 // pred_check
          %p155 = pneg %p62
        $region34: #{tpu_custom_call.1} parent=27 // pred_check_branch
          %157 = sbr.rel (%p155) target = $region36
        $region35: #{tpu_custom_call.1} parent=27 // pred_region
          %158 = dma.done [#allocation6], 6144
        $region36: #{tpu_custom_call.1} parent=27 // pred_fallthru
          _
        %s159 = sand.u32 %s28, 1
        %s160 = scalar_lea.sflag [#allocation3], %s159
        %s161 = sand.u32 %s28, 1
        %s162 = smul.addr %s161, 8
        %s163 = scalar_lea.vmem [#allocation2], %s162
        %p164 = pneg %p41
        %p165 = pneg %p38
        %p166 = pneg %p62
        %p167 = pneg %p59
        %p168 = pneg %p88
        %p169 = pneg %p85
        %s170 = sand.u32 %s75, 1
        %s171 = scalar_lea.sflag [#allocation4], %s170
        %s172 = sand.u32 %s75, 1
        %s173 = smul.addr %s172, 8
        %s174 = scalar_lea.vmem [#allocation7], %s173
        %v176 = vld [vmem:[%s150] sm:$0xff]
        %v177 = vld [vmem:[#allocation5] sm:$0xff]
        %v178 = vld [vmem:[#allocation5 + $0x8] sm:$0xf]
        %v179 = vld [vmem:[#allocation5 + $0xc] sm:$0xff]
        %v180 = vld [vmem:[#allocation5 + $0x14] sm:$0xf]
        %v181 = vld [vmem:[#allocation5 + $0x18] sm:$0xff]
        %v182 = vld [vmem:[#allocation5 + $0x20] sm:$0xf]
        %v183 = vld [vmem:[#allocation5 + $0x24] sm:$0xff]
        %v184 = vld [vmem:[#allocation5 + $0x2c] sm:$0xf]
        %v185 = vld [vmem:[#allocation5 + $0x30] sm:$0xff]
        %v186 = vld [vmem:[#allocation5 + $0x38] sm:$0xf]
        %v187 = vld [vmem:[#allocation5 + $0x3c] sm:$0xff]
        %v188 = vld [vmem:[#allocation5 + $0x44] sm:$0xf]
        %v189 = vld [vmem:[#allocation5 + $0x48] sm:$0xff]
        %v190 = vld [vmem:[#allocation5 + $0x50] sm:$0xf]
        %v191 = vld [vmem:[#allocation5 + $0x54] sm:$0xff]
        %v192 = vld [vmem:[#allocation5 + $0x5c] sm:$0xf]
        %v193 = vld [vmem:[#allocation5 + $0x60] sm:$0xff]
        %v194 = vld [vmem:[#allocation5 + $0x68] sm:$0xf]
        %v195 = vld [vmem:[#allocation5 + $0x6c] sm:$0xff]
        %v196 = vld [vmem:[#allocation5 + $0x74] sm:$0xf]
        %v197 = vld [vmem:[#allocation5 + $0x78] sm:$0xff]
        %v198 = vld [vmem:[#allocation5 + $0x80] sm:$0xf]
        %v199 = vld [vmem:[#allocation5 + $0x84] sm:$0xff]
        %v200 = vld [vmem:[#allocation5 + $0x8c] sm:$0xf]
        %v201 = vld [vmem:[#allocation5 + $0x90] sm:$0xff]
        %v202 = vld [vmem:[#allocation5 + $0x98] sm:$0xf]
        %v203 = vld [vmem:[#allocation5 + $0x9c] sm:$0xff]
        %v204 = vld [vmem:[#allocation5 + $0xa4] sm:$0xf]
        %v205 = vld [vmem:[#allocation5 + $0xa8] sm:$0xff]
        %v206 = vld [vmem:[#allocation5 + $0xb0] sm:$0xf]
        %v207 = vld [vmem:[#allocation5 + $0xb4] sm:$0xff]
        %v208 = vld [vmem:[#allocation5 + $0xbc] sm:$0xf]
        %v209 = vld [vmem:[#allocation5 + $0xc0] sm:$0xff]
        %v210 = vld [vmem:[#allocation5 + $0xc8] sm:$0xf]
        %v211 = vld [vmem:[#allocation5 + $0xcc] sm:$0xff]
        %v212 = vld [vmem:[#allocation5 + $0xd4] sm:$0xf]
        %v213 = vld [vmem:[#allocation5 + $0xd8] sm:$0xff]
        %v214 = vld [vmem:[#allocation5 + $0xe0] sm:$0xf]
        %v215 = vld [vmem:[#allocation5 + $0xe4] sm:$0xff]
        %v216 = vld [vmem:[#allocation5 + $0xec] sm:$0xf]
        %v217 = vld [vmem:[#allocation5 + $0xf0] sm:$0xff]
        %v218 = vld [vmem:[#allocation5 + $0xf8] sm:$0xf]
        %v219 = vld [vmem:[#allocation5 + $0xfc] sm:$0xff]
        %v220 = vld [vmem:[#allocation5 + $0x104] sm:$0xf]
        %v221 = vld [vmem:[#allocation5 + $0x108] sm:$0xff]
        %v222 = vld [vmem:[#allocation5 + $0x110] sm:$0xf]
        %v223 = vld [vmem:[#allocation5 + $0x114] sm:$0xff]
        %v224 = vld [vmem:[#allocation5 + $0x11c] sm:$0xf]
        %v225 = vld [vmem:[#allocation5 + $0x120] sm:$0xff]
        %v226 = vld [vmem:[#allocation5 + $0x128] sm:$0xf]
        %v227 = vld [vmem:[#allocation5 + $0x12c] sm:$0xff]
        %v228 = vld [vmem:[#allocation5 + $0x134] sm:$0xf]
        %v229 = vld [vmem:[#allocation5 + $0x138] sm:$0xff]
        %v230 = vld [vmem:[#allocation5 + $0x140] sm:$0xf]
        %v231 = vld [vmem:[#allocation5 + $0x144] sm:$0xff]
        %v232 = vld [vmem:[#allocation5 + $0x14c] sm:$0xf]
        %v233 = vld [vmem:[#allocation5 + $0x150] sm:$0xff]
        %v234 = vld [vmem:[#allocation5 + $0x158] sm:$0xf]
        %v235 = vld [vmem:[#allocation5 + $0x15c] sm:$0xff]
        %v236 = vld [vmem:[#allocation5 + $0x164] sm:$0xf]
        %v237 = vld [vmem:[#allocation5 + $0x168] sm:$0xff]
        %v238 = vld [vmem:[#allocation5 + $0x170] sm:$0xf]
        %v239 = vld [vmem:[#allocation5 + $0x174] sm:$0xff]
        %v240 = vld [vmem:[#allocation5 + $0x17c] sm:$0xf]
        %v242 = vunpack.c.l.b16 %v176
        %v243 = vunpack.c.h.b16 %v176
        %v244 = vpack.c.b16 %v242, %v242
        %v245 = vpack.c.b16 %v243, %v243
        %v312 = vunpack.c.l.b16 %v177
        %v313 = vunpack.c.h.b16 %v177
        %v314 = vunpack.c.l.b16 %v178
        %v315 = vunpack.c.l.b16 %v179
        %v316 = vunpack.c.h.b16 %v179
        %v317 = vunpack.c.l.b16 %v180
        %v318 = vunpack.c.l.b16 %v181
        %v319 = vunpack.c.h.b16 %v181
        %v320 = vunpack.c.l.b16 %v182
        %v321 = vunpack.c.l.b16 %v183
        %v322 = vunpack.c.h.b16 %v183
        %v323 = vunpack.c.l.b16 %v184
        %v324 = vunpack.c.l.b16 %v185
        %v325 = vunpack.c.h.b16 %v185
        %v326 = vunpack.c.l.b16 %v186
        %v327 = vunpack.c.l.b16 %v187
        %v328 = vunpack.c.h.b16 %v187
        %v329 = vunpack.c.l.b16 %v188
        %v330 = vunpack.c.l.b16 %v189
        %v331 = vunpack.c.h.b16 %v189
        %v332 = vunpack.c.l.b16 %v190
        %v333 = vunpack.c.l.b16 %v191
        %v334 = vunpack.c.h.b16 %v191
        %v335 = vunpack.c.l.b16 %v192
        %v336 = vunpack.c.l.b16 %v193
        %v337 = vunpack.c.h.b16 %v193
        %v338 = vunpack.c.l.b16 %v194
        %v339 = vunpack.c.l.b16 %v195
        %v340 = vunpack.c.h.b16 %v195
        %v341 = vunpack.c.l.b16 %v196
        %v342 = vunpack.c.l.b16 %v197
        %v343 = vunpack.c.h.b16 %v197
        %v344 = vunpack.c.l.b16 %v198
        %v345 = vunpack.c.l.b16 %v199
        %v346 = vunpack.c.h.b16 %v199
        %v347 = vunpack.c.l.b16 %v200
        %v348 = vunpack.c.l.b16 %v201
        %v349 = vunpack.c.h.b16 %v201
        %v350 = vunpack.c.l.b16 %v202
        %v351 = vunpack.c.l.b16 %v203
        %v352 = vunpack.c.h.b16 %v203
        %v353 = vunpack.c.l.b16 %v204
        %v354 = vunpack.c.l.b16 %v205
        %v355 = vunpack.c.h.b16 %v205
        %v356 = vunpack.c.l.b16 %v206
        %v357 = vunpack.c.l.b16 %v207
        %v358 = vunpack.c.h.b16 %v207
        %v359 = vunpack.c.l.b16 %v208
        %v360 = vunpack.c.l.b16 %v209
        %v361 = vunpack.c.h.b16 %v209
        %v362 = vunpack.c.l.b16 %v210
        %v363 = vunpack.c.l.b16 %v211
        %v364 = vunpack.c.h.b16 %v211
        %v365 = vunpack.c.l.b16 %v212
        %v366 = vunpack.c.l.b16 %v213
        %v367 = vunpack.c.h.b16 %v213
        %v368 = vunpack.c.l.b16 %v214
        %v369 = vunpack.c.l.b16 %v215
        %v370 = vunpack.c.h.b16 %v215
        %v371 = vunpack.c.l.b16 %v216
        %v372 = vunpack.c.l.b16 %v217
        %v373 = vunpack.c.h.b16 %v217
        %v374 = vunpack.c.l.b16 %v218
        %v375 = vunpack.c.l.b16 %v219
        %v376 = vunpack.c.h.b16 %v219
        %v377 = vunpack.c.l.b16 %v220
        %v378 = vunpack.c.l.b16 %v221
        %v379 = vunpack.c.h.b16 %v221
        %v380 = vunpack.c.l.b16 %v222
        %v381 = vunpack.c.l.b16 %v223
        %v382 = vunpack.c.h.b16 %v223
        %v383 = vunpack.c.l.b16 %v224
        %v384 = vunpack.c.l.b16 %v225
        %v385 = vunpack.c.h.b16 %v225
        %v386 = vunpack.c.l.b16 %v226
        %v387 = vunpack.c.l.b16 %v227
        %v388 = vunpack.c.h.b16 %v227
        %v389 = vunpack.c.l.b16 %v228
        %v390 = vunpack.c.l.b16 %v229
        %v391 = vunpack.c.h.b16 %v229
        %v392 = vunpack.c.l.b16 %v230
        %v393 = vunpack.c.l.b16 %v231
        %v394 = vunpack.c.h.b16 %v231
        %v395 = vunpack.c.l.b16 %v232
        %v396 = vunpack.c.l.b16 %v233
        %v397 = vunpack.c.h.b16 %v233
        %v398 = vunpack.c.l.b16 %v234
        %v399 = vunpack.c.l.b16 %v235
        %v400 = vunpack.c.h.b16 %v235
        %v401 = vunpack.c.l.b16 %v236
        %v402 = vunpack.c.l.b16 %v237
        %v403 = vunpack.c.h.b16 %v237
        %v404 = vunpack.c.l.b16 %v238
        %v405 = vunpack.c.l.b16 %v239
        %v406 = vunpack.c.h.b16 %v239
        %v407 = vunpack.c.l.b16 %v240
        %v408 = vpack.c.b16 %v315, %v312
        %v409 = vpack.c.b16 %v316, %v313
        %v410 = vpack.c.b16 %v317, %v314
        %v411 = vpack.c.b16 %v321, %v318
        %v412 = vpack.c.b16 %v322, %v319
        %v413 = vpack.c.b16 %v323, %v320
        %v414 = vpack.c.b16 %v327, %v324
        %v415 = vpack.c.b16 %v328, %v325
        %v416 = vpack.c.b16 %v329, %v326
        %v417 = vpack.c.b16 %v333, %v330
        %v418 = vpack.c.b16 %v334, %v331
        %v419 = vpack.c.b16 %v335, %v332
        %v420 = vpack.c.b16 %v339, %v336
        %v421 = vpack.c.b16 %v340, %v337
        %v422 = vpack.c.b16 %v341, %v338
        %v423 = vpack.c.b16 %v345, %v342
        %v424 = vpack.c.b16 %v346, %v343
        %v425 = vpack.c.b16 %v347, %v344
        %v426 = vpack.c.b16 %v351, %v348
        %v427 = vpack.c.b16 %v352, %v349
        %v428 = vpack.c.b16 %v353, %v350
        %v429 = vpack.c.b16 %v357, %v354
        %v430 = vpack.c.b16 %v358, %v355
        %v431 = vpack.c.b16 %v359, %v356
        %v432 = vpack.c.b16 %v363, %v360
        %v433 = vpack.c.b16 %v364, %v361
        %v434 = vpack.c.b16 %v365, %v362
        %v435 = vpack.c.b16 %v369, %v366
        %v436 = vpack.c.b16 %v370, %v367
        %v437 = vpack.c.b16 %v371, %v368
        %v438 = vpack.c.b16 %v375, %v372
        %v439 = vpack.c.b16 %v376, %v373
        %v440 = vpack.c.b16 %v377, %v374
        %v441 = vpack.c.b16 %v381, %v378
        %v442 = vpack.c.b16 %v382, %v379
        %v443 = vpack.c.b16 %v383, %v380
        %v444 = vpack.c.b16 %v387, %v384
        %v445 = vpack.c.b16 %v388, %v385
        %v446 = vpack.c.b16 %v389, %v386
        %v447 = vpack.c.b16 %v393, %v390
        %v448 = vpack.c.b16 %v394, %v391
        %v449 = vpack.c.b16 %v395, %v392
        %v450 = vpack.c.b16 %v399, %v396
        %v451 = vpack.c.b16 %v400, %v397
        %v452 = vpack.c.b16 %v401, %v398
        %v453 = vpack.c.b16 %v405, %v402
        %v454 = vpack.c.b16 %v406, %v403
        %v455 = vpack.c.b16 %v407, %v404
        %504 = vmatprep.subr.bf16.mxu0 %v409
        %505 = vmatpush1.bf16.msra.mxu0 %v408
        %506 = vmatprep.subr.bf16.mxu0 %v412
        %507 = vmatpush1.bf16.msra.mxu0 %v411
        %508 = vmatprep.subr.bf16.mxu0 %v415
        %509 = vmatpush1.bf16.msra.mxu0 %v414
        %510 = vmatprep.subr.bf16.mxu0 %v418
        %511 = vmatpush1.bf16.msra.mxu0 %v417
        %512 = vmatprep.subr.bf16.mxu0 %v421
        %513 = vmatpush1.bf16.msra.mxu0 %v420
        %514 = vmatprep.subr.bf16.mxu0 %v424
        %515 = vmatpush1.bf16.msra.mxu0 %v423
        %516 = vmatprep.subr.bf16.mxu0 %v427
        %517 = vmatpush1.bf16.msra.mxu0 %v426
        %518 = vmatprep.subr.bf16.mxu0 %v430
        %519 = vmatpush1.bf16.msra.mxu0 %v429
        %520 = vmatprep.subr.bf16.mxu0 %v433
        %521 = vmatpush1.bf16.msra.mxu0 %v432
        %522 = vmatprep.subr.bf16.mxu0 %v436
        %523 = vmatpush1.bf16.msra.mxu0 %v435
        %524 = vmatprep.subr.bf16.mxu0 %v439
        %525 = vmatpush1.bf16.msra.mxu0 %v438
        %526 = vmatprep.subr.bf16.mxu0 %v442
        %527 = vmatpush1.bf16.msra.mxu0 %v441
        %528 = vmatprep.subr.bf16.mxu0 %v445
        %529 = vmatpush1.bf16.msra.mxu0 %v444
        %530 = vmatprep.subr.bf16.mxu0 %v448
        %531 = vmatpush1.bf16.msra.mxu0 %v447
        %532 = vmatprep.subr.bf16.mxu0 %v451
        %533 = vmatpush1.bf16.msra.mxu0 %v450
        %534 = vmatprep.subr.bf16.mxu0 %v454
        %535 = vmatpush1.bf16.msra.mxu0 %v453
        %536 = vmatprep.mubr.bf16.mxu0 %v245
        %537 = vmatmul.mubr.bf16.gmra.mrb[0].mxu0 %v244
        %v538 = vpop.f32.mrb[0].mxu0
        %v539 = vadd.f32 0.0, %v538
        %v540 = vpop.f32.mrb[0].mxu0
        %v541 = vadd.f32 0.0, %v540
        %v542 = vpop.f32.mrb[0].mxu0
        %v543 = vpop.f32.mrb[0].mxu0
        %544 = vdwg.mxu0
        %545 = vmatprep.subr.bf16.mxu0 0
        %546 = vmatpush1.bf16.msra.mxu0 %v410
        %547 = vmatprep.subr.bf16.mxu0 0
        %548 = vmatpush1.bf16.msra.mxu0 %v413
        %549 = vmatprep.subr.bf16.mxu0 0
        %550 = vmatpush1.bf16.msra.mxu0 %v416
        %551 = vmatprep.subr.bf16.mxu0 0
        %552 = vmatpush1.bf16.msra.mxu0 %v419
        %553 = vmatprep.subr.bf16.mxu0 0
        %554 = vmatpush1.bf16.msra.mxu0 %v422
        %555 = vmatprep.subr.bf16.mxu0 0
        %556 = vmatpush1.bf16.msra.mxu0 %v425
        %557 = vmatprep.subr.bf16.mxu0 0
        %558 = vmatpush1.bf16.msra.mxu0 %v428
        %559 = vmatprep.subr.bf16.mxu0 0
        %560 = vmatpush1.bf16.msra.mxu0 %v431
        %561 = vmatprep.subr.bf16.mxu0 0
        %562 = vmatpush1.bf16.msra.mxu0 %v434
        %563 = vmatprep.subr.bf16.mxu0 0
        %564 = vmatpush1.bf16.msra.mxu0 %v437
        %565 = vmatprep.subr.bf16.mxu0 0
        %566 = vmatpush1.bf16.msra.mxu0 %v440
        %567 = vmatprep.subr.bf16.mxu0 0
        %568 = vmatpush1.bf16.msra.mxu0 %v443
        %569 = vmatprep.subr.bf16.mxu0 0
        %570 = vmatpush1.bf16.msra.mxu0 %v446
        %571 = vmatprep.subr.bf16.mxu0 0
        %572 = vmatpush1.bf16.msra.mxu0 %v449
        %573 = vmatprep.subr.bf16.mxu0 0
        %574 = vmatpush1.bf16.msra.mxu0 %v452
        %575 = vmatprep.subr.bf16.mxu0 0
        %576 = vmatpush1.bf16.msra.mxu0 %v455
        %577 = vmatprep.mubr.bf16.mxu0 %v245
        %578 = vmatmul.mubr.bf16.gmra.mrb[0].mxu0 %v244
        %v579 = vpop.f32.mrb[0].mxu0
        %v580 = vadd.f32 0.0, %v579
        %v581 = vpop.f32.mrb[0].mxu0
        %v582 = vpop.f32.mrb[0].mxu0
        %v583 = vpop.f32.mrb[0].mxu0
        %584 = vdwg.mxu0
        %v585 = vpack.c.bf16 %v539, %v539
        %v586 = vpack.c.bf16 %v541, %v541
        %v587 = vpack.c.bf16 %v580, %v580
        %v588 = vlaneseq
        %v589 = vshrl.u32 %v588, 7
        %v590 = vlaneseq
        %v591 = vand.u32 %v590, 127
        %vm592 = vcmp.ge.s32.totalorder %v589, %v591
        %v593 = vsel %vm592, 0.0, -1e+30
        %594 = vmatprep.subr.bf16.mxu0 0
        %595 = vmatpush1.bf16.xpose.msra.mxu0 %v585
        %596 = vmatprep.subr.bf16.mxu0 0
        %597 = vmatpush1.bf16.xpose.msra.mxu0 0
        %598 = vmatprep.subr.bf16.mxu0 0
        %599 = vmatpush1.bf16.xpose.msra.mxu0 0
        %600 = vmatprep.subr.bf16.mxu0 0
        %601 = vmatpush1.bf16.xpose.msra.mxu0 0
        %602 = vmatprep.subr.bf16.mxu0 0
        %603 = vmatpush1.bf16.xpose.msra.mxu0 0
        %604 = vmatprep.subr.bf16.mxu0 0
        %605 = vmatpush1.bf16.xpose.msra.mxu0 0
        %606 = vmatprep.subr.bf16.mxu0 0
        %607 = vmatpush1.bf16.xpose.msra.mxu0 0
        %608 = vmatprep.subr.bf16.mxu0 0
        %609 = vmatpush1.bf16.xpose.msra.mxu0 0
        %610 = vmatprep.subr.bf16.mxu0 0
        %611 = vmatpush1.bf16.xpose.msra.mxu0 0
        %612 = vmatprep.subr.bf16.mxu0 0
        %613 = vmatpush1.bf16.xpose.msra.mxu0 0
        %614 = vmatprep.subr.bf16.mxu0 0
        %615 = vmatpush1.bf16.xpose.msra.mxu0 0
        %616 = vmatprep.subr.bf16.mxu0 0
        %617 = vmatpush1.bf16.xpose.msra.mxu0 0
        %618 = vmatprep.subr.bf16.mxu0 0
        %619 = vmatpush1.bf16.xpose.msra.mxu0 0
        %620 = vmatprep.subr.bf16.mxu0 0
        %621 = vmatpush1.bf16.xpose.msra.mxu0 0
        %622 = vmatprep.subr.bf16.mxu0 0
        %623 = vmatpush1.bf16.xpose.msra.mxu0 0
        %624 = vmatprep.subr.bf16.mxu0 0
        %625 = vmatpush1.bf16.xpose.msra.mxu0 0
        %626 = vmatprep.mubr.bf16.mxu0 0
        %627 = vmatmul.mubr.bf16.gmra.mrb[0].mxu0 %v586
        %v628 = vpop.f32.mrb[0].mxu0
        %v629 = vadd.f32 %v593, %v628
        %v630 = vpop.f32.mrb[0].mxu0
        %v631 = vpop.f32.mrb[0].mxu0
        %v632 = vpop.f32.mrb[0].mxu0
        %633 = vdwg.mxu0
        %vm634 = vcmask 64512
        %v635 = vsel %vm634, %v629, -inf
        %636 = vmax.xlane.f32.xlu0 %v635
        %v637 = vpop.xlane.xlu0 %636
        %v638 = vsub.f32 %v629, %v637
        %v639 = vmul.f32 %v638, 1.442695
        %v640 = vpow.pop %v639
        %v641 = vsel %vm634, %v640, 0.0
        %642 = vadd.xlane.f32.xlu0 %v641
        %v643 = vpop.xlane.xlu0 %642
        %v644 = vrcp.pop %v643
        %v645 = vmul.f32 %v640, %v644
        %v646 = vpack.c.bf16 %v645, %v645
        %v648 = vsel %vm634, %v646, 0
        %vm650 = vcmask 1043456
        %v652 = vsel %vm650, %v587, 0
        %654 = vmatprep.subr.bf16.mxu0 0
        %655 = vmatpush1.bf16.msra.mxu0 %v652
        %656 = vmatprep.subr.bf16.mxu0 0
        %657 = vmatpush1.bf16.msra.mxu0 0
        %658 = vmatprep.subr.bf16.mxu0 0
        %659 = vmatpush1.bf16.msra.mxu0 0
        %660 = vmatprep.subr.bf16.mxu0 0
        %661 = vmatpush1.bf16.msra.mxu0 0
        %662 = vmatprep.subr.bf16.mxu0 0
        %663 = vmatpush1.bf16.msra.mxu0 0
        %664 = vmatprep.subr.bf16.mxu0 0
        %665 = vmatpush1.bf16.msra.mxu0 0
        %666 = vmatprep.subr.bf16.mxu0 0
        %667 = vmatpush1.bf16.msra.mxu0 0
        %668 = vmatprep.subr.bf16.mxu0 0
        %669 = vmatpush1.bf16.msra.mxu0 0
        %670 = vmatprep.subr.bf16.mxu0 0
        %671 = vmatpush1.bf16.msra.mxu0 0
        %672 = vmatprep.subr.bf16.mxu0 0
        %673 = vmatpush1.bf16.msra.mxu0 0
        %674 = vmatprep.subr.bf16.mxu0 0
        %675 = vmatpush1.bf16.msra.mxu0 0
        %676 = vmatprep.subr.bf16.mxu0 0
        %677 = vmatpush1.bf16.msra.mxu0 0
        %678 = vmatprep.subr.bf16.mxu0 0
        %679 = vmatpush1.bf16.msra.mxu0 0
        %680 = vmatprep.subr.bf16.mxu0 0
        %681 = vmatpush1.bf16.msra.mxu0 0
        %682 = vmatprep.subr.bf16.mxu0 0
        %683 = vmatpush1.bf16.msra.mxu0 0
        %684 = vmatprep.subr.bf16.mxu0 0
        %685 = vmatpush1.bf16.msra.mxu0 0
        %686 = vmatprep.mubr.bf16.mxu0 0
        %687 = vmatmul.mubr.bf16.gmra.mrb[0].mxu0 %v648
        %v688 = vpop.f32.mrb[0].mxu0
        %v689 = vadd.f32 0.0, %v688
        %v690 = vpop.f32.mrb[0].mxu0
        %v691 = vpop.f32.mrb[0].mxu0
        %v692 = vpop.f32.mrb[0].mxu0
        %693 = vdwg.mxu0
        %vm694 = vcmask 523264
        %695 = vst.msk [vmem:[%s174] sm:$0xff] %vm694, %v689
        %s696 = sand.u32 %s75, 1
        %s697 = scalar_lea.sflag [#allocation4], %s696
        %s698 = sand.u32 %s75, 1
        %s699 = smul.addr %s698, 8
        %s700 = scalar_lea.vmem [#allocation7], %s699
        // Predicated region
        $region37: #{tpu_custom_call.1} parent=27 // pred_check
          %p701 = pneg %p85
        $region38: #{tpu_custom_call.1} parent=27 // pred_check_branch
          %703 = sbr.rel (%p701) target = $region40
        $region39: #{tpu_custom_call.1} parent=27 // pred_region
          %s705 = ssub.s32 128, 128
          %706 = vsyncadd %s697, %s705
          %s707 = smul.addr %s20, 128
          %s708 = scalar_lea.hbm %s2, %s707
          %s710 = sshll.u32 %s700, 4
          %s711 = int_to_ptr.vmem [resolvable:$true] %s710
          %713 = dma.vmem_to_hbm [thread:$0]  %s711, 128, %s708, %s697
        $region40: #{tpu_custom_call.1} parent=27 // pred_fallthru
          _
      $region28: #{tpu_custom_call.1} parent=5 // pred_fallthru
        _
      %p714 = scmp.le.s32.totalorder 2, %s15
      // Predicated region
      $region41: #{tpu_custom_call.1} parent=5 // pred_check
        %p715 = pneg %p714
      $region42: #{tpu_custom_call.1} parent=5 // pred_check_branch
        %717 = sbr.rel (%p715) target = $region44
      $region43: #{tpu_custom_call.1} parent=5 // pred_region
        %s718 = ssub.s32 %s15, 2
        // Predicated region
        $region45: #{tpu_custom_call.1} parent=43 // pred_check
          %p719 = pneg %p91
        $region46: #{tpu_custom_call.1} parent=43 // pred_check_branch
          %721 = sbr.rel (%p719) target = $region48
        $region47: #{tpu_custom_call.1} parent=43 // pred_region
          %s722 = sand.u32 %s76, 1
          %s723 = scalar_lea.sflag [#allocation4], %s722
          %s724 = sand.u32 %s76, 1
          %s725 = smul.addr %s724, 8
          %s726 = scalar_lea.vmem [#allocation7], %s725
          %727 = dma.done %s723, 128
        $region48: #{tpu_custom_call.1} parent=43 // pred_fallthru
          _
      $region44: #{tpu_custom_call.1} parent=5 // pred_fallthru
        _
    $region6: #{tpu_custom_call.1} parent=1 // loop_footer
      %s19 = sadd.s32 1, %s15
    $region7: #{tpu_custom_call.1} parent=1 // loop_footer_branch
      %14 = sbr.rel target = $region3
    $region8: #{tpu_custom_call.1} parent=1 // loop_exit
      _
    %728 = vsyncpa [#allocation3], 1
    %s729 = scalar_lea.sflag [#allocation3], 1
    %730 = vsyncpa %s729, 1
    %731 = vsyncpa [#allocation6], 1
    %732 = vsyncpa [#allocation4], 1
    %s733 = scalar_lea.sflag [#allocation4], 1
    %734 = vsyncpa %s733, 1

</llo_original>
